<compile_context>
chip_gen: v7x
topology: tpu7x:2x2x1
jax: 0.10.0
libtpu: 0.0.40
codegen_flags: <defaults>
</compile_context>

<pallas_src>
import functools
import math

import jax
import jax.numpy as jnp
from jax.experimental import pallas as pl
from jax.experimental.pallas import tpu as pltpu


LANE = 128  # pad all feature dims (and N) to multiples of the lane width


def _round_up(x, m):
    return ((x + m - 1) // m) * m


def _pad2d(x, rows, cols):
    return jnp.pad(x, ((0, rows - x.shape[0]), (0, cols - x.shape[1])))


# ----------------------------- Pallas kernel --------------------------------

def gnn_fused_kernel(adj_ref, feat_ref, w_ref, b_ref, o_ref,
                     h_cur, h_next, xw, *, block_rows):
    """Fused multi-layer GCN.

    Grid = (n_layers, n_row_tiles). Per step (l, i):
      if i == 0:  h_cur <- (features if l == 0 else h_next); xw <- h_cur @ W_l
      tile = act(adj[i*TM:(i+1)*TM, :] @ xw + b_l)          # MXU + VPU
      h_next[tile rows] <- tile ;  o[l, tile rows] <- tile
    Both matmuls are bf16 on the MXU with f32 accumulation.
    """
    l = pl.program_id(0)
    i = pl.program_id(1)
    n_layers = pl.num_programs(0)

    # Load / advance the resident full-graph activations once per layer.
    @pl.when(jnp.logical_and(l == 0, i == 0))
    def _():
        h_cur[...] = feat_ref[...]

    @pl.when(jnp.logical_and(l > 0, i == 0))
    def _():
        h_cur[...] = h_next[...]

    # Feature transform for the whole graph, once per layer: (N, D) @ (D, D).
    @pl.when(i == 0)
    def _():
        xw[...] = jnp.dot(
            h_cur[...], w_ref[0],
            preferred_element_type=jnp.float32).astype(xw.dtype)

    # Neighbourhood aggregation for this row tile: (TM, N) @ (N, D)   [MXU]
    x = jnp.dot(adj_ref[...], xw[...], preferred_element_type=jnp.float32)
    x = x + b_ref[0]                                   # bias (f32)    [VPU]

    row0 = pl.multiple_of(i * block_rows, block_rows)
    not_last = l < n_layers - 1

    @pl.when(not_last)
    def _():
        y = jnp.maximum(x, 0.0)                        # ReLU on hidden layers
        h_next[pl.ds(row0, block_rows), :] = y.astype(h_next.dtype)
        o_ref[0] = y.astype(o_ref.dtype)

    @pl.when(jnp.logical_not(not_last))
    def _():
        o_ref[0] = x.astype(o_ref.dtype)               # last layer: no act.


# ------------------------------ host wrapper ---------------------------------

def gnn_forward(adj, features, params, *, block_rows=256):
    """Fused GCN forward pass.

    adj      : (N, N) float32 dense adjacency (row-normalized).
    features : (N, F) float32 node features.
    params   : list of (W (din, dout) f32, b (1, dout) f32) per layer.
    Returns  : (N, dim_out) float32.
    """
    n = adj.shape[0]
    n_layers = len(params)
    dim_out = params[-1][0].shape[1]

    # Pad node count and all feature dims to lane-dense multiples of 128.
    n_pad = _round_up(n, LANE)
    d_pad = _round_up(
        max([features.shape[1]] + [w.shape[1] for w, _ in params]), LANE)
    if block_rows > n_pad or n_pad % block_rows or block_rows % 8:
        block_rows = LANE
    n_tiles = n_pad // block_rows

    # bf16 operands for the MXU (f32 accumulation happens inside the kernel).
    adj_p = _pad2d(adj.astype(jnp.float32), n_pad, n_pad).astype(jnp.bfloat16)
    feat_p = _pad2d(features.astype(jnp.float32), n_pad, d_pad).astype(jnp.bfloat16)
    w_p = jnp.stack([_pad2d(w, d_pad, d_pad) for w, _ in params]).astype(jnp.bfloat16)
    b_p = jnp.stack([_pad2d(b.reshape(1, -1), 1, d_pad) for _, b in params]
                    ).astype(jnp.float32)

    flops = n_layers * (2 * n_pad * d_pad * d_pad + 2 * n_pad * n_pad * d_pad)
    bytes_accessed = (n_layers * n_pad * n_pad * 2        # adj tiles (bf16)
                      + n_pad * d_pad * 2                  # features
                      + n_layers * (d_pad * d_pad * 2 + d_pad * 4)  # W, b
                      + n_layers * n_pad * d_pad * 4)      # per-layer outputs

    out = pl.pallas_call(
        functools.partial(gnn_fused_kernel, block_rows=block_rows),
        out_shape=jax.ShapeDtypeStruct((n_layers, n_pad, d_pad), jnp.float32),
        grid=(n_layers, n_tiles),
        in_specs=[
            # adjacency row tile: streamed + software-pipelined.
            pl.BlockSpec((block_rows, n_pad), lambda l, i: (i, 0)),
            # features / per-layer weight & bias: resident in VMEM.
            pl.BlockSpec((n_pad, d_pad), lambda l, i: (0, 0)),
            pl.BlockSpec((1, d_pad, d_pad), lambda l, i: (l, 0, 0)),
            pl.BlockSpec((1, 1, d_pad), lambda l, i: (l, 0, 0)),
        ],
        out_specs=pl.BlockSpec((1, block_rows, d_pad), lambda l, i: (l, i, 0)),
        scratch_shapes=[
            pltpu.VMEM((n_pad, d_pad), jnp.bfloat16),   # h_cur  (layer input)
            pltpu.VMEM((n_pad, d_pad), jnp.bfloat16),   # h_next (layer output)
            pltpu.VMEM((n_pad, d_pad), jnp.bfloat16),   # xw = h_cur @ W_l
        ],
        compiler_params=pltpu.CompilerParams(
            # Layer axis is sequential; row tiles share the xw / h scratch of
            # their layer, so a megacore ("parallel") split would be wrong.
            dimension_semantics=("arbitrary", "arbitrary"),
            vmem_limit_bytes=48 * 1024 * 1024,
        ),
        cost_estimate=pl.CostEstimate(
            flops=flops, transcendentals=0, bytes_accessed=bytes_accessed),
    )(adj_p, feat_p, w_p, b_p)

    # Final layer, real nodes, real output dims.
    return out[n_layers - 1, :n, :dim_out]


# --------------------------- parameter construction --------------------------

def xavier_uniform(key, fan_in, fan_out):
    """Matches torch.nn.init.xavier_uniform_ (gain=1)."""
    bound = math.sqrt(6.0 / (fan_in + fan_out))
    return jax.random.uniform(
        key, (fan_in, fan_out), dtype=jnp.float32, minval=-bound, maxval=bound)


def make_gnn_params(key, dim_feats, dim_h, dim_out, n_layers):
    """GNN(dim_feats, dim_h, dim_out, n_layers, relu, dropout, 'gcn').

    Layer dims (gcn -> heads all 1):
      layer 0        : dim_feats -> dim_h   (relu)
      layers 1..n-1  : dim_h     -> dim_h   (relu)
      last layer     : dim_h     -> dim_out (no activation)
    """
    dims = [dim_feats] + [dim_h] * n_layers + [dim_out]
    params = []
    for li in range(len(dims) - 1):
        key, wk = jax.random.split(key)
        w = xavier_uniform(wk, dims[li], dims[li + 1])
        b = jnp.zeros((1, dims[li + 1]), dtype=jnp.float32)  # constant_(0.0)
        params.append((w, b))
    return params


# --------------------------------- demo --------------------------------------

if __name__ == "__main__":
    # Small deterministic example consistent with the module:
    #   dim_feats=16, dim_h=32, dim_out=8, n_layers=2  ->  3 GCN layers.
    N, DIM_FEATS, DIM_H, DIM_OUT, N_LAYERS = 16, 16, 32, 8, 2

    key = jax.random.PRNGKey(0)
    k_adj, k_feat, k_param = jax.random.split(key, 3)

    # Dense row-normalized adjacency with self loops (deterministic).
    adj_raw = (jax.random.uniform(k_adj, (N, N)) > 0.6).astype(jnp.float32)
    adj = adj_raw + jnp.eye(N, dtype=jnp.float32)
    deg = jnp.sum(adj, axis=1, keepdims=True)
    adj = adj / deg

    features = jax.random.normal(k_feat, (N, DIM_FEATS), dtype=jnp.float32)
    params = make_gnn_params(k_param, DIM_FEATS, DIM_H, DIM_OUT, N_LAYERS)

    # block_rows=64 so the demo exercises >1 row tile (N padded to 128).
    out = gnn_forward(adj, features, params, block_rows=64)
    out = jax.block_until_ready(out)
    assert out.shape == (N, DIM_OUT)

    # Reference 1: plain-JAX with the identical bf16-operand / f32-accumulate
    # math as the kernel (tight tolerance).
    adj_b = adj.astype(jnp.bfloat16)
    h = features.astype(jnp.bfloat16)
    ref_bf16 = None
    for li, (w, b) in enumerate(params):
        xw = jnp.dot(h, w.astype(jnp.bfloat16),
                     preferred_element_type=jnp.float32).astype(jnp.bfloat16)
        x = jnp.dot(adj_b, xw, preferred_element_type=jnp.float32) + b
        if li < len(params) - 1:
            h = jnp.maximum(x, 0.0).astype(jnp.bfloat16)
        else:
            ref_bf16 = x
    assert jnp.allclose(out, ref_bf16, atol=1e-4, rtol=1e-4)

    # Reference 2: full-f32 math (sanity check that the bf16 MXU path is close).
    h32 = features
    for li, (w, b) in enumerate(params):
        h32 = adj @ (h32 @ w) + b
        if li < len(params) - 1:
            h32 = jnp.maximum(h32, 0.0)
    assert jnp.allclose(out, h32, atol=5e-2, rtol=5e-2)

    print("KERNEL_OK")
</pallas_src>

<mosaic_0001>
module attributes {stable_mosaic.version = 11 : i64} {
  func.func @gnn_fused_kernel(%arg0: i32, %arg1: i32, %arg2: memref<64x128xbf16, #tpu.memory_space<vmem>>, %arg3: memref<128x128xbf16, #tpu.memory_space<vmem>>, %arg4: memref<1x128x128xbf16, #tpu.memory_space<vmem>>, %arg5: memref<1x1x128xf32, #tpu.memory_space<vmem>>, %arg6: memref<1x64x128xf32, #tpu.memory_space<vmem>>, %arg7: memref<128x128xbf16, #tpu.memory_space<vmem>>, %arg8: memref<128x128xbf16, #tpu.memory_space<vmem>>, %arg9: memref<128x128xbf16, #tpu.memory_space<vmem>>) attributes {dimension_semantics = [#tpu.dimension_semantics<arbitrary>, #tpu.dimension_semantics<arbitrary>], iteration_bounds = array<i64: 3, 2>, scalar_prefetch = 0 : i64, scratch_operands = 3 : i64, tpu.core_type = #tpu.core_type<tc>, window_params = [{transform_indices = @transform_0, window_bounds = array<i64: 64, 128>}, {pipeline_mode = #tpu.pipeline_mode<synchronous>, transform_indices = @transform_1, window_bounds = array<i64: 128, 128>}, {transform_indices = @transform_2, window_bounds = array<i64: 1, 128, 128>}, {transform_indices = @transform_3, window_bounds = array<i64: 1, 1, 128>}, {transform_indices = @transform_4, window_bounds = array<i64: 1, 64, 128>}]} {
    %c0_i32 = arith.constant 0 : i32
    %0 = arith.cmpi eq, %arg0, %c0_i32 : i32
    %c0_i32_0 = arith.constant 0 : i32
    %1 = arith.cmpi eq, %arg1, %c0_i32_0 : i32
    %2 = arith.andi %0, %1 : i1
    %3 = arith.extui %2 : i1 to i32
    %c0_i32_1 = arith.constant 0 : i32
    %4 = arith.cmpi ne, %3, %c0_i32_1 : i32
    scf.if %4 {
      %c0_15 = arith.constant 0 : index
      %c0_16 = arith.constant 0 : index
      %28 = vector.load %arg3[%c0_15, %c0_16] : memref<128x128xbf16, #tpu.memory_space<vmem>>, vector<128x128xbf16>
      %c0_17 = arith.constant 0 : index
      %c0_18 = arith.constant 0 : index
      %29 = vector.load %arg7[%c0_17, %c0_18] : memref<128x128xbf16, #tpu.memory_space<vmem>>, vector<128x128xbf16>
      tpu.vector_store %arg7[%c0_17, %c0_18], %28 {strides = array<i32>} : memref<128x128xbf16, #tpu.memory_space<vmem>>, vector<128x128xbf16>,
    } else {
    }
    %c0_i32_2 = arith.constant 0 : i32
    %5 = arith.cmpi sgt, %arg0, %c0_i32_2 : i32
    %c0_i32_3 = arith.constant 0 : i32
    %6 = arith.cmpi eq, %arg1, %c0_i32_3 : i32
    %7 = arith.andi %5, %6 : i1
    %8 = arith.extui %7 : i1 to i32
    %c0_i32_4 = arith.constant 0 : i32
    %9 = arith.cmpi ne, %8, %c0_i32_4 : i32
    scf.if %9 {
      %c0_15 = arith.constant 0 : index
      %c0_16 = arith.constant 0 : index
      %28 = vector.load %arg8[%c0_15, %c0_16] : memref<128x128xbf16, #tpu.memory_space<vmem>>, vector<128x128xbf16>
      %c0_17 = arith.constant 0 : index
      %c0_18 = arith.constant 0 : index
      %29 = vector.load %arg7[%c0_17, %c0_18] : memref<128x128xbf16, #tpu.memory_space<vmem>>, vector<128x128xbf16>
      tpu.vector_store %arg7[%c0_17, %c0_18], %28 {strides = array<i32>} : memref<128x128xbf16, #tpu.memory_space<vmem>>, vector<128x128xbf16>,
    } else {
    }
    %c0_i32_5 = arith.constant 0 : i32
    %10 = arith.cmpi eq, %arg1, %c0_i32_5 : i32
    %11 = arith.extui %10 : i1 to i32
    %c0_i32_6 = arith.constant 0 : i32
    %12 = arith.cmpi ne, %11, %c0_i32_6 : i32
    scf.if %12 {
      %c0_15 = arith.constant 0 : index
      %c0_16 = arith.constant 0 : index
      %28 = vector.load %arg7[%c0_15, %c0_16] : memref<128x128xbf16, #tpu.memory_space<vmem>>, vector<128x128xbf16>
      %c0_17 = arith.constant 0 : index
      %c0_18 = arith.constant 0 : index
      %c0_19 = arith.constant 0 : index
      %29 = vector.load %arg4[%c0_17, %c0_18, %c0_19] : memref<1x128x128xbf16, #tpu.memory_space<vmem>>, vector<1x128x128xbf16>
      %30 = vector.shape_cast %29 : vector<1x128x128xbf16> to vector<128x128xbf16>
      %cst_20 = arith.constant dense<0.000000e+00> : vector<128x128xf32>
      %31 = tpu.matmul %28, %30, %cst_20 {dimension_numbers = #tpu.dot_dimension_numbers<[1], [0], [0], [1], [0, 0, 1, 1], [], []>} : vector<128x128xbf16>, vector<128x128xbf16>, vector<128x128xf32> -> vector<128x128xf32>
      %32 = arith.truncf %31 : vector<128x128xf32> to vector<128x128xbf16>
      %c0_21 = arith.constant 0 : index
      %c0_22 = arith.constant 0 : index
      %33 = vector.load %arg9[%c0_21, %c0_22] : memref<128x128xbf16, #tpu.memory_space<vmem>>, vector<128x128xbf16>
      tpu.vector_store %arg9[%c0_21, %c0_22], %32 {strides = array<i32>} : memref<128x128xbf16, #tpu.memory_space<vmem>>, vector<128x128xbf16>,
    } else {
    }
    %c0 = arith.constant 0 : index
    %c0_7 = arith.constant 0 : index
    %13 = vector.load %arg2[%c0, %c0_7] : memref<64x128xbf16, #tpu.memory_space<vmem>>, vector<64x128xbf16>
    %c0_8 = arith.constant 0 : index
    %c0_9 = arith.constant 0 : index
    %14 = vector.load %arg9[%c0_8, %c0_9] : memref<128x128xbf16, #tpu.memory_space<vmem>>, vector<128x128xbf16>
    %cst = arith.constant dense<0.000000e+00> : vector<64x128xf32>
    %15 = tpu.matmul %13, %14, %cst {dimension_numbers = #tpu.dot_dimension_numbers<[1], [0], [0], [1], [0, 0, 1, 1], [], []>} : vector<64x128xbf16>, vector<128x128xbf16>, vector<64x128xf32> -> vector<64x128xf32>
    %c0_10 = arith.constant 0 : index
    %c0_11 = arith.constant 0 : index
    %c0_12 = arith.constant 0 : index
    %16 = vector.load %arg5[%c0_10, %c0_11, %c0_12] : memref<1x1x128xf32, #tpu.memory_space<vmem>>, vector<1x1x128xf32>
    %17 = vector.shape_cast %16 : vector<1x1x128xf32> to vector<1x128xf32>
    %18 = vector.broadcast %17 : vector<1x128xf32> to vector<64x128xf32>
    %19 = arith.addf %15, %18 : vector<64x128xf32>
    %c64_i32 = arith.constant 64 : i32
    %20 = arith.muli %arg1, %c64_i32 : i32
    %21 = tpu.assume_multiple %20, 64 : i32
    %c2_i32 = arith.constant 2 : i32
    %22 = arith.cmpi slt, %arg0, %c2_i32 : i32
    %23 = arith.extui %22 : i1 to i32
    %c0_i32_13 = arith.constant 0 : i32
    %24 = arith.cmpi ne, %23, %c0_i32_13 : i32
    scf.if %24 {
      %cst_15 = arith.constant 0.000000e+00 : f32
      %28 = vector.broadcast %cst_15 : f32 to vector<64x128xf32>
      %29 = arith.maximumf %19, %28 : vector<64x128xf32>
      %30 = arith.truncf %29 : vector<64x128xf32> to vector<64x128xbf16>
      %31 = arith.index_cast %21 : i32 to index
      %c0_16 = arith.constant 0 : index
      %32 = vector.load %arg8[%31, %c0_16] : memref<128x128xbf16, #tpu.memory_space<vmem>>, vector<64x128xbf16>
      tpu.vector_store %arg8[%31, %c0_16], %30 {strides = array<i32>} : memref<128x128xbf16, #tpu.memory_space<vmem>>, vector<64x128xbf16>,
      %c0_17 = arith.constant 0 : index
      %c0_18 = arith.constant 0 : index
      %c0_19 = arith.constant 0 : index
      %33 = vector.load %arg6[%c0_17, %c0_18, %c0_19] : memref<1x64x128xf32, #tpu.memory_space<vmem>>, vector<1x64x128xf32>
      %34 = vector.shape_cast %33 : vector<1x64x128xf32> to vector<64x128xf32>
      %35 = vector.shape_cast %29 : vector<64x128xf32> to vector<1x64x128xf32>
      tpu.vector_store %arg6[%c0_17, %c0_18, %c0_19], %35 {strides = array<i32>} : memref<1x64x128xf32, #tpu.memory_space<vmem>>, vector<1x64x128xf32>,
    } else {
    }
    %true = arith.constant true
    %25 = arith.xori %22, %true : i1
    %26 = arith.extui %25 : i1 to i32
    %c0_i32_14 = arith.constant 0 : i32
    %27 = arith.cmpi ne, %26, %c0_i32_14 : i32
    scf.if %27 {
      %c0_15 = arith.constant 0 : index
      %c0_16 = arith.constant 0 : index
      %c0_17 = arith.constant 0 : index
      %28 = vector.load %arg6[%c0_15, %c0_16, %c0_17] : memref<1x64x128xf32, #tpu.memory_space<vmem>>, vector<1x64x128xf32>
      %29 = vector.shape_cast %28 : vector<1x64x128xf32> to vector<64x128xf32>
      %30 = vector.shape_cast %19 : vector<64x128xf32> to vector<1x64x128xf32>
      tpu.vector_store %arg6[%c0_15, %c0_16, %c0_17], %30 {strides = array<i32>} : memref<1x64x128xf32, #tpu.memory_space<vmem>>, vector<1x64x128xf32>,
    } else {
    }
    return
  }
  func.func @transform_0(%arg0: i32, %arg1: i32) -> (i32, i32) {
    %c0_i32 = arith.constant 0 : i32
    %c0_i32_0 = arith.constant 0 : i32
    return %arg1, %c0_i32 : i32, i32
  }
  func.func @transform_1(%arg0: i32, %arg1: i32) -> (i32, i32) {
    %c0_i32 = arith.constant 0 : i32
    %c0_i32_0 = arith.constant 0 : i32
    %c0_i32_1 = arith.constant 0 : i32
    return %c0_i32, %c0_i32_0 : i32, i32
  }
  func.func @transform_2(%arg0: i32, %arg1: i32) -> (i32, i32, i32) {
    %c0_i32 = arith.constant 0 : i32
    %c0_i32_0 = arith.constant 0 : i32
    %c0_i32_1 = arith.constant 0 : i32
    return %arg0, %c0_i32, %c0_i32_0 : i32, i32, i32
  }
  func.func @transform_3(%arg0: i32, %arg1: i32) -> (i32, i32, i32) {
    %c0_i32 = arith.constant 0 : i32
    %c0_i32_0 = arith.constant 0 : i32
    %c0_i32_1 = arith.constant 0 : i32
    return %arg0, %c0_i32, %c0_i32_0 : i32, i32, i32
  }
  func.func @transform_4(%arg0: i32, %arg1: i32) -> (i32, i32, i32) {
    %c0_i32 = arith.constant 0 : i32
    %c0_i32_0 = arith.constant 0 : i32
    return %arg0, %arg1, %c0_i32 : i32, i32, i32
  }
}

</mosaic_0001>

<llo_original>
// kernel: tpu_custom_call.1
$region0: #{tpu_custom_call.1}
  #allocation0 [shape = 'u32[]', space=smem, size = 0x4, offset = 0x4, fixed_abs, tag = 'smem constant byte address 0x4 - core index']
  #allocation1 [shape = 'u32[144,128]{1,0:T(1,128)}', space=vmem, size = 0x12000, scoped, tag = 'internal scratch']
  #allocation2 [shape = 'bf16[128,128]{1,0:T(16,128)(2,1)}', space=vmem, size = 0x8000, scoped, tag = 'scratch operand']
  #allocation3 [shape = 'bf16[128,128]{1,0:T(16,128)(2,1)}', space=vmem, size = 0x8000, scoped, tag = 'scratch operand']
  #allocation4 [shape = 'bf16[128,128]{1,0:T(16,128)(2,1)}', space=vmem, size = 0x8000, scoped, tag = 'scratch operand']
  %s0 = inlined_call_operand.hbm [shape: bf16[128,128], index: 0, kind: input, shape index: {}]
  %s1 = inlined_call_operand.hbm [shape: bf16[128,128], index: 1, kind: input, shape index: {}]
  %s2 = inlined_call_operand.hbm [shape: bf16[3,128,128], index: 2, kind: input, shape index: {}]
  %s3 = inlined_call_operand.vmem [shape: f32[3,1,128], index: 3, kind: input, shape index: {}]
  %s4 = inlined_call_operand.hbm [shape: f32[3,128,128], index: 4, kind: output, shape index: {}]
  %s5 = sld [smem:[#allocation0]]
  $region81: #{tpu_custom_call.1} parent=0
    _
  %s7 = ssub.s32 1, %s5
  %s8 = scalar_select 0, %s7, %s5
  $region1: #{tpu_custom_call.1} parent=0
    #allocation5 [shape = 'u8[32768]{0}', space=vmem, size = 0x8000, scoped, tag = 'input window, operand 0']
    #allocation6 [shape = 's32[2]{0}', space=sflag, size = 0x8, scoped, tag = 'scoped memory for tpu_custom_call.1']
    #allocation7 [shape = 's32[2]{0}', space=sflag, size = 0x8, scoped, tag = 'scoped memory for tpu_custom_call.1']
    #allocation8 [shape = 'u8[32768]{0}', space=vmem, size = 0x8000, scoped, tag = 'input window, operand 1, single buffered']
    #allocation9 [shape = 's32[1]{0}', space=sflag, size = 0x4, scoped, tag = 'scoped memory for tpu_custom_call.1']
    #allocation10 [shape = 'u8[65536]{0}', space=vmem, size = 0x10000, scoped, tag = 'input window, operand 2']
    #allocation11 [shape = 'u8[65536]{0}', space=vmem, size = 0x10000, scoped, tag = 'output window, operand 0']
    %9 = vsyncpa [#allocation6], 0
    %s10 = scalar_lea.sflag [#allocation6], 1
    %11 = vsyncpa %s10, 0
    %12 = vsyncpa [#allocation9], 0
    %13 = vsyncpa [#allocation7], 0
    %s14 = scalar_lea.sflag [#allocation7], 1
    %15 = vsyncpa %s14, 0
    loop: start=0, step=1, limit=8
    $region2: #{tpu_custom_call.1} parent=1 // loop_pre_header
      _
    $region3: #{tpu_custom_call.1} parent=1 // loop_header
      %s17 = sphi 0, %s21
      %p18 = scmp.ge.s32.totalorder %s17, 8
      %s24 = sphi 0, %s36
      %s25 = sphi 0, %s32
      %s26 = sphi 0, %s24
      %s27 = sphi 0, %s25
      %s28 = sphi 0, %s26
      %s29 = sphi 0, %s27
      %s39 = sphi 0, %s41
      %s42 = sphi 0, %s39
      %s43 = sphi 0, %s42
      %s59 = sphi 0, %s43
      %s63 = sphi 0, %s63
      %s65 = sphi 0, %s63
      %s66 = sphi 0, %s65
      %s80 = sphi 0, %s66
      %s86 = sphi 0, %s88
      %s89 = sphi 0, %s86
      %s90 = sphi 0, %s89
      %s106 = sphi 0, %s90
      %s112 = sphi 0, %s114
      %s115 = sphi 0, %s112
      %s116 = sphi 0, %s115
      %s132 = sphi 0, %s116
      %s140 = sphi 0, %s142
      %s143 = sphi 0, %s140
      %s144 = sphi 0, %s143
      %s160 = sphi 0, %s144
    $region4: #{tpu_custom_call.1} parent=1 // loop_header_branch
      %20 = sbr.rel (%p18) target = $region8
    $region5: #{tpu_custom_call.1} parent=1 // loop_body
      %s22 = ssub.s32 %s17, 1
      %s23 = ssub.s32 %s17, 2
      %s30 = sadd.s32 1, %s25
      %p31 = scmp.ge.s32.totalorder %s30, 2
      %s32 = scalar_select %p31, 0, %s30
      %s33 = sadd.s32 1, %s24
      %s34 = scalar_select %p31, %s33, %s24
      %p35 = scmp.ge.s32.totalorder %s34, 3
      %s36 = scalar_select %p35, 0, %s34
      %s37 = ssub.s32 %s25, %s32
      %p38 = scmp.eq.s32.totalorder %s37, 0
      %s40 = sadd.s32 %s39, 1
      %s41 = scalar_select %p38, %s39, %s40
      %p44 = pneg %p38
      %p45 = scmp.eq.s32.totalorder %s17, 5
      %p46 = por %p44, %p45
      %p47 = scmp.ne.s32.totalorder %s39, %s42
      %p48 = scmp.eq.s32.totalorder %s17, 0
      %p49 = por %p47, %p48
      %p50 = scmp.ne.s32.totalorder %s39, %s42
      %p51 = scmp.eq.s32.totalorder %s22, 5
      %p52 = por %p50, %p51
      %p53 = scmp.ne.s32.totalorder %s42, %s43
      %p54 = scmp.eq.s32.totalorder %s22, 0
      %p55 = por %p53, %p54
      %p56 = scmp.ne.s32.totalorder %s42, %s43
      %p57 = scmp.eq.s32.totalorder %s23, 5
      %p58 = por %p56, %p57
      %p60 = scmp.ne.s32.totalorder %s43, %s59
      %p61 = scmp.eq.s32.totalorder %s23, 0
      %p62 = por %p60, %p61
      %s64 = sadd.s32 %s63, 1
      %p67 = scmp.eq.s32.totalorder %s17, 5
      %p68 = scmp.ne.s32.totalorder %s63, %s65
      %p69 = scmp.eq.s32.totalorder %s17, 0
      %p70 = por %p68, %p69
      %p71 = scmp.ne.s32.totalorder %s63, %s65
      %p72 = scmp.eq.s32.totalorder %s22, 5
      %p73 = por %p71, %p72
      %p74 = scmp.ne.s32.totalorder %s65, %s66
      %p75 = scmp.eq.s32.totalorder %s22, 0
      %p76 = por %p74, %p75
      %p77 = scmp.ne.s32.totalorder %s65, %s66
      %p78 = scmp.eq.s32.totalorder %s23, 5
      %p79 = por %p77, %p78
      %p81 = scmp.ne.s32.totalorder %s66, %s80
      %p82 = scmp.eq.s32.totalorder %s23, 0
      %p83 = por %p81, %p82
      %s84 = ssub.s32 %s24, %s36
      %p85 = scmp.eq.s32.totalorder %s84, 0
      %s87 = sadd.s32 %s86, 1
      %s88 = scalar_select %p85, %s86, %s87
      %p91 = pneg %p85
      %p92 = scmp.eq.s32.totalorder %s17, 5
      %p93 = por %p91, %p92
      %p94 = scmp.ne.s32.totalorder %s86, %s89
      %p95 = scmp.eq.s32.totalorder %s17, 0
      %p96 = por %p94, %p95
      %p97 = scmp.ne.s32.totalorder %s86, %s89
      %p98 = scmp.eq.s32.totalorder %s22, 5
      %p99 = por %p97, %p98
      %p100 = scmp.ne.s32.totalorder %s89, %s90
      %p101 = scmp.eq.s32.totalorder %s22, 0
      %p102 = por %p100, %p101
      %p103 = scmp.ne.s32.totalorder %s89, %s90
      %p104 = scmp.eq.s32.totalorder %s23, 5
      %p105 = por %p103, %p104
      %p107 = scmp.ne.s32.totalorder %s90, %s106
      %p108 = scmp.eq.s32.totalorder %s23, 0
      %p109 = por %p107, %p108
      %s110 = ssub.s32 %s24, %s36
      %p111 = scmp.eq.s32.totalorder %s110, 0
      %s113 = sadd.s32 %s112, 1
      %s114 = scalar_select %p111, %s112, %s113
      %p117 = pneg %p111
      %p118 = scmp.eq.s32.totalorder %s17, 5
      %p119 = por %p117, %p118
      %p120 = scmp.ne.s32.totalorder %s112, %s115
      %p121 = scmp.eq.s32.totalorder %s17, 0
      %p122 = por %p120, %p121
      %p123 = scmp.ne.s32.totalorder %s112, %s115
      %p124 = scmp.eq.s32.totalorder %s22, 5
      %p125 = por %p123, %p124
      %p126 = scmp.ne.s32.totalorder %s115, %s116
      %p127 = scmp.eq.s32.totalorder %s22, 0
      %p128 = por %p126, %p127
      %p129 = scmp.ne.s32.totalorder %s115, %s116
      %p130 = scmp.eq.s32.totalorder %s23, 5
      %p131 = por %p129, %p130
      %p133 = scmp.ne.s32.totalorder %s116, %s132
      %p134 = scmp.eq.s32.totalorder %s23, 0
      %p135 = por %p133, %p134
      %s136 = ssub.s32 %s24, %s36
      %s137 = ssub.s32 %s25, %s32
      %s138 = sor.u32 %s136, %s137
      %p139 = scmp.eq.s32.totalorder %s138, 0
      %s141 = sadd.s32 %s140, 1
      %s142 = scalar_select %p139, %s140, %s141
      %p145 = pneg %p139
      %p146 = scmp.eq.s32.totalorder %s17, 5
      %p147 = por %p145, %p146
      %p148 = scmp.ne.s32.totalorder %s140, %s143
      %p149 = scmp.eq.s32.totalorder %s17, 0
      %p150 = por %p148, %p149
      %p151 = scmp.ne.s32.totalorder %s140, %s143
      %p152 = scmp.eq.s32.totalorder %s22, 5
      %p153 = por %p151, %p152
      %p154 = scmp.ne.s32.totalorder %s143, %s144
      %p155 = scmp.eq.s32.totalorder %s22, 0
      %p156 = por %p154, %p155
      %p157 = scmp.ne.s32.totalorder %s143, %s144
      %p158 = scmp.eq.s32.totalorder %s23, 5
      %p159 = por %p157, %p158
      %p161 = scmp.ne.s32.totalorder %s144, %s160
      %p162 = scmp.eq.s32.totalorder %s23, 0
      %p163 = por %p161, %p162
      %p164 = scmp.le.s32.totalorder 1, %s17
      %p165 = scmp.lt.s32.totalorder %s17, 7
      %p166 = pnand %p164, %p165
      %p167 = pneg %p166
      // Predicated region
      $region9: #{tpu_custom_call.1} parent=5 // pred_check
        _
      $region10: #{tpu_custom_call.1} parent=5 // pred_check_branch
        %169 = sbr.rel (%p166) target = $region12
      $region11: #{tpu_custom_call.1} parent=5 // pred_region
        %s170 = ssub.s32 %s17, 1
        // Predicated region
        $region13: #{tpu_custom_call.1} parent=11 // pred_check
          %p171 = pneg %p76
        $region14: #{tpu_custom_call.1} parent=11 // pred_check_branch
          %173 = sbr.rel (%p171) target = $region16
        $region15: #{tpu_custom_call.1} parent=11 // pred_region
          %s175 = ssub.s32 1024, 1024
          %176 = vsyncadd [#allocation9], %s175
          %s177 = sshll.u32 [#allocation8], 4
          %s178 = int_to_ptr.vmem [resolvable:$true] %s177
          %183 = dma.hbm_to_vmem [thread:$0]  %s1, 1024, %s178, [#allocation9], 64, 64, 4
        $region16: #{tpu_custom_call.1} parent=11 // pred_fallthru
          _
      $region12: #{tpu_custom_call.1} parent=5 // pred_fallthru
        _
      %p184 = scmp.lt.s32.totalorder %s17, 6
      // Predicated region
      $region17: #{tpu_custom_call.1} parent=5 // pred_check
        %p185 = pneg %p184
      $region18: #{tpu_custom_call.1} parent=5 // pred_check_branch
        %187 = sbr.rel (%p185) target = $region20
      $region19: #{tpu_custom_call.1} parent=5 // pred_region
        // Predicated region
        $region21: #{tpu_custom_call.1} parent=19 // pred_check
          %p188 = pneg %p49
        $region22: #{tpu_custom_call.1} parent=19 // pred_check_branch
          %190 = sbr.rel (%p188) target = $region24
        $region23: #{tpu_custom_call.1} parent=19 // pred_region
          %s191 = sand.u32 %s17, 1
          %s192 = scalar_lea.sflag [#allocation6], %s191
          %s193 = sand.u32 %s39, 1
          %s194 = smul.addr %s193, 32
          %s195 = scalar_lea.vmem [#allocation5], %s194
          %s196 = smul.u32 8, %s25
          %s198 = ssub.s32 512, 512
          %199 = vsyncadd %s192, %s198
          %s200 = smul.addr %s196, 64
          %s201 = scalar_lea.hbm %s0, %s200
          %s202 = sshll.u32 %s195, 4
          %s203 = int_to_ptr.vmem [resolvable:$true] %s202
          %208 = dma.hbm_to_vmem [thread:$0]  %s201, 512, %s203, %s192, 64, 64, 4
        $region24: #{tpu_custom_call.1} parent=19 // pred_fallthru
          _
        // Predicated region
        $region25: #{tpu_custom_call.1} parent=19 // pred_check
          %p209 = pneg %p96
        $region26: #{tpu_custom_call.1} parent=19 // pred_check_branch
          %211 = sbr.rel (%p209) target = $region28
        $region27: #{tpu_custom_call.1} parent=19 // pred_region
          %s212 = sand.u32 %s17, 1
          %s213 = scalar_lea.sflag [#allocation6], %s212
          %s214 = sand.u32 %s86, 1
          %s215 = smul.addr %s214, 64
          %s216 = scalar_lea.vmem [#allocation10], %s215
          %s218 = ssub.s32 1024, 1024
          %219 = vsyncadd %s213, %s218
          %s220 = smul.addr %s24, 16
          %s221 = smul.addr %s220, 64
          %s222 = scalar_lea.hbm %s2, %s221
          %s223 = sshll.u32 %s216, 4
          %s224 = int_to_ptr.vmem [resolvable:$true] %s223
          %229 = dma.hbm_to_vmem [thread:$0]  %s222, 1024, %s224, %s213, 64, 64, 4
        $region28: #{tpu_custom_call.1} parent=19 // pred_fallthru
          _
        // Predicated region
        $region29: #{tpu_custom_call.1} parent=19 // pred_check
          %p230 = pneg %p122
        $region30: #{tpu_custom_call.1} parent=19 // pred_check_branch
          %232 = sbr.rel (%p230) target = $region32
        $region31: #{tpu_custom_call.1} parent=19 // pred_region
          %p233 = scmp.lt.s32.totalorder %s24, 2
          %s234 = scalar_select %p233, %s24, 2
          %s235 = scalar_lea.vmem %s3, %s234
        $region32: #{tpu_custom_call.1} parent=19 // pred_fallthru
          _
      $region20: #{tpu_custom_call.1} parent=5 // pred_fallthru
        _
      %p236 = scmp.le.s32.totalorder 1, %s17
      %p237 = scmp.lt.s32.totalorder %s17, 7
      %p238 = pnand %p236, %p237
      %p239 = pneg %p238
      // Predicated region
      $region33: #{tpu_custom_call.1} parent=5 // pred_check
        _
      $region34: #{tpu_custom_call.1} parent=5 // pred_check_branch
        %241 = sbr.rel (%p238) target = $region36
      $region35: #{tpu_custom_call.1} parent=5 // pred_region
        %s242 = ssub.s32 %s17, 1
        %s243 = sand.u32 %s22, 1
        %s244 = scalar_lea.sflag [#allocation6], %s243
        %s245 = sand.u32 %s42, 1
        %s246 = smul.addr %s245, 32
        %s247 = scalar_lea.vmem [#allocation5], %s246
        // Predicated region
        $region37: #{tpu_custom_call.1} parent=35 // pred_check
          %p248 = pneg %p55
        $region38: #{tpu_custom_call.1} parent=35 // pred_check_branch
          %250 = sbr.rel (%p248) target = $region40
        $region39: #{tpu_custom_call.1} parent=35 // pred_region
          %251 = dma.done %s244, 512
        $region40: #{tpu_custom_call.1} parent=35 // pred_fallthru
          _
        // Predicated region
        $region41: #{tpu_custom_call.1} parent=35 // pred_check
          %p252 = pneg %p76
        $region42: #{tpu_custom_call.1} parent=35 // pred_check_branch
          %254 = sbr.rel (%p252) target = $region44
        $region43: #{tpu_custom_call.1} parent=35 // pred_region
          %255 = dma.done [#allocation9], 1024
        $region44: #{tpu_custom_call.1} parent=35 // pred_fallthru
          _
        %s256 = sand.u32 %s22, 1
        %s257 = scalar_lea.sflag [#allocation6], %s256
        %s258 = sand.u32 %s89, 1
        %s259 = smul.addr %s258, 64
        %s260 = scalar_lea.vmem [#allocation10], %s259
        // Predicated region
        $region45: #{tpu_custom_call.1} parent=35 // pred_check
          %p261 = pneg %p102
        $region46: #{tpu_custom_call.1} parent=35 // pred_check_branch
          %263 = sbr.rel (%p261) target = $region48
        $region47: #{tpu_custom_call.1} parent=35 // pred_region
          %264 = dma.done %s257, 1024
        $region48: #{tpu_custom_call.1} parent=35 // pred_fallthru
          _
        %s265 = sand.u32 %s22, 1
        %s266 = scalar_lea.sflag [#allocation6], %s265
        %s267 = sand.u32 %s42, 1
        %s268 = smul.addr %s267, 32
        %s269 = scalar_lea.vmem [#allocation5], %s268
        %p270 = pneg %p55
        %p271 = pneg %p52
        %p272 = pneg %p76
        %p273 = pneg %p73
        %s274 = sand.u32 %s22, 1
        %s275 = scalar_lea.sflag [#allocation6], %s274
        %s276 = sand.u32 %s89, 1
        %s277 = smul.addr %s276, 64
        %s278 = scalar_lea.vmem [#allocation10], %s277
        %p279 = pneg %p102
        %p280 = pneg %p99
        %p281 = scmp.lt.s32.totalorder %s26, 2
        %s282 = scalar_select %p281, %s26, 2
        %s283 = scalar_lea.vmem %s3, %s282
        %p284 = pneg %p128
        %p285 = pneg %p125
        %p286 = pneg %p156
        %p287 = pneg %p153
        %s288 = sand.u32 %s143, 1
        %s289 = scalar_lea.sflag [#allocation7], %s288
        %s290 = sand.u32 %s143, 1
        %s291 = smul.addr %s290, 64
        %s292 = scalar_lea.vmem [#allocation11], %s291
        %s293 = smul.u32 8, %s27
        %p294 = scmp.lt.s32.totalorder %s26, 2
        %s295 = scalar_select %p294, %s26, 2
        %s296 = scalar_lea.vmem %s3, %s295
        %s297 = smul.u32 8, %s27
        %p299 = scmp.eq.s32.totalorder %s26, 0
        %p300 = scmp.eq.s32.totalorder %s27, 0
        %p301 = pnand %p299, %p300
        %p302 = pneg %p301
        // Predicated region
        $region49: #{tpu_custom_call.1} parent=35 // pred_check
          _
        $region50: #{tpu_custom_call.1} parent=35 // pred_check_branch
          %304 = sbr.rel (%p301) target = $region52
        $region51: #{tpu_custom_call.1} parent=35 // pred_region
          %v305 = vld [vmem:[#allocation8] sm:$0xf]
          %v306 = vld [vmem:[#allocation8 + $0x4] sm:$0xf]
          %v307 = vld [vmem:[#allocation8 + $0x8] sm:$0xf]
          %v308 = vld [vmem:[#allocation8 + $0xc] sm:$0xf]
          %v309 = vld [vmem:[#allocation8 + $0x10] sm:$0xf]
          %v310 = vld [vmem:[#allocation8 + $0x14] sm:$0xf]
          %v311 = vld [vmem:[#allocation8 + $0x18] sm:$0xf]
          %v312 = vld [vmem:[#allocation8 + $0x1c] sm:$0xf]
          %v313 = vld [vmem:[#allocation8 + $0x20] sm:$0xf]
          %v314 = vld [vmem:[#allocation8 + $0x24] sm:$0xf]
          %v315 = vld [vmem:[#allocation8 + $0x28] sm:$0xf]
          %v316 = vld [vmem:[#allocation8 + $0x2c] sm:$0xf]
          %v317 = vld [vmem:[#allocation8 + $0x30] sm:$0xf]
          %v318 = vld [vmem:[#allocation8 + $0x34] sm:$0xf]
          %v319 = vld [vmem:[#allocation8 + $0x38] sm:$0xf]
          %v320 = vld [vmem:[#allocation8 + $0x3c] sm:$0xf]
          %v337 = vunpack.c.l.b16 %v305
          %v338 = vunpack.c.l.b16 %v306
          %v339 = vunpack.c.l.b16 %v307
          %v340 = vunpack.c.l.b16 %v308
          %v341 = vunpack.c.l.b16 %v309
          %v342 = vunpack.c.l.b16 %v310
          %v343 = vunpack.c.l.b16 %v311
          %v344 = vunpack.c.l.b16 %v312
          %v345 = vunpack.c.l.b16 %v313
          %v346 = vunpack.c.l.b16 %v314
          %v347 = vunpack.c.l.b16 %v315
          %v348 = vunpack.c.l.b16 %v316
          %v349 = vunpack.c.l.b16 %v317
          %v350 = vunpack.c.l.b16 %v318
          %v351 = vunpack.c.l.b16 %v319
          %v352 = vunpack.c.l.b16 %v320
          %v353 = vpack.c.b16 %v338, %v337
          %v354 = vpack.c.b16 %v340, %v339
          %v355 = vpack.c.b16 %v342, %v341
          %v356 = vpack.c.b16 %v344, %v343
          %v357 = vpack.c.b16 %v346, %v345
          %v358 = vpack.c.b16 %v348, %v347
          %v359 = vpack.c.b16 %v350, %v349
          %v360 = vpack.c.b16 %v352, %v351
          %369 = vst [vmem:[#allocation2] sm:$0xff] %v353
          %370 = vst [vmem:[#allocation2 + $0x8] sm:$0xff] %v354
          %371 = vst [vmem:[#allocation2 + $0x10] sm:$0xff] %v355
          %372 = vst [vmem:[#allocation2 + $0x18] sm:$0xff] %v356
          %373 = vst [vmem:[#allocation2 + $0x20] sm:$0xff] %v357
          %374 = vst [vmem:[#allocation2 + $0x28] sm:$0xff] %v358
          %375 = vst [vmem:[#allocation2 + $0x30] sm:$0xff] %v359
          %376 = vst [vmem:[#allocation2 + $0x38] sm:$0xff] %v360
        $region52: #{tpu_custom_call.1} parent=35 // pred_fallthru
          _
        %p377 = scmp.gt.s32.totalorder %s26, 0
        %p378 = pnand %p377, %p300
        %p379 = pneg %p378
        // Predicated region
        $region53: #{tpu_custom_call.1} parent=35 // pred_check
          _
        $region54: #{tpu_custom_call.1} parent=35 // pred_check_branch
          %381 = sbr.rel (%p378) target = $region56
        $region55: #{tpu_custom_call.1} parent=35 // pred_region
          %v382 = vld [vmem:[#allocation3] sm:$0xff]
          %v383 = vld [vmem:[#allocation3 + $0x8] sm:$0xff]
          %v384 = vld [vmem:[#allocation3 + $0x10] sm:$0xff]
          %v385 = vld [vmem:[#allocation3 + $0x18] sm:$0xff]
          %v386 = vld [vmem:[#allocation3 + $0x20] sm:$0xff]
          %v387 = vld [vmem:[#allocation3 + $0x28] sm:$0xff]
          %v388 = vld [vmem:[#allocation3 + $0x30] sm:$0xff]
          %v389 = vld [vmem:[#allocation3 + $0x38] sm:$0xff]
          %390 = vst [vmem:[#allocation2] sm:$0xff] %v382
          %391 = vst [vmem:[#allocation2 + $0x8] sm:$0xff] %v383
          %392 = vst [vmem:[#allocation2 + $0x10] sm:$0xff] %v384
          %393 = vst [vmem:[#allocation2 + $0x18] sm:$0xff] %v385
          %394 = vst [vmem:[#allocation2 + $0x20] sm:$0xff] %v386
          %395 = vst [vmem:[#allocation2 + $0x28] sm:$0xff] %v387
          %396 = vst [vmem:[#allocation2 + $0x30] sm:$0xff] %v388
          %397 = vst [vmem:[#allocation2 + $0x38] sm:$0xff] %v389
        $region56: #{tpu_custom_call.1} parent=35 // pred_fallthru
          _
        // Predicated region
        $region57: #{tpu_custom_call.1} parent=35 // pred_check
          %p398 = pneg %p300
        $region58: #{tpu_custom_call.1} parent=35 // pred_check_branch
          %400 = sbr.rel (%p398) target = $region60
        $region59: #{tpu_custom_call.1} parent=35 // pred_region
          %v401 = vld [vmem:[#allocation2] sm:$0xff]
          %v402 = vld [vmem:[#allocation2 + $0x8] sm:$0xff]
          %v403 = vld [vmem:[#allocation2 + $0x10] sm:$0xff]
          %v404 = vld [vmem:[#allocation2 + $0x18] sm:$0xff]
          %v405 = vld [vmem:[#allocation2 + $0x20] sm:$0xff]
          %v406 = vld [vmem:[#allocation2 + $0x28] sm:$0xff]
          %v407 = vld [vmem:[#allocation2 + $0x30] sm:$0xff]
          %v408 = vld [vmem:[#allocation2 + $0x38] sm:$0xff]
          %v409 = vld [vmem:[%s260] sm:$0xf]
          %v410 = vld [vmem:[%s260 + $0x4] sm:$0xf]
          %v411 = vld [vmem:[%s260 + $0x8] sm:$0xf]
          %v412 = vld [vmem:[%s260 + $0xc] sm:$0xf]
          %v413 = vld [vmem:[%s260 + $0x10] sm:$0xf]
          %v414 = vld [vmem:[%s260 + $0x14] sm:$0xf]
          %v415 = vld [vmem:[%s260 + $0x18] sm:$0xf]
          %v416 = vld [vmem:[%s260 + $0x1c] sm:$0xf]
          %v417 = vld [vmem:[%s260 + $0x20] sm:$0xf]
          %v418 = vld [vmem:[%s260 + $0x24] sm:$0xf]
          %v419 = vld [vmem:[%s260 + $0x28] sm:$0xf]
          %v420 = vld [vmem:[%s260 + $0x2c] sm:$0xf]
          %v421 = vld [vmem:[%s260 + $0x30] sm:$0xf]
          %v422 = vld [vmem:[%s260 + $0x34] sm:$0xf]
          %v423 = vld [vmem:[%s260 + $0x38] sm:$0xf]
          %v424 = vld [vmem:[%s260 + $0x3c] sm:$0xf]
          %v441 = vunpack.c.l.b16 %v409
          %v442 = vunpack.c.l.b16 %v410
          %v443 = vunpack.c.l.b16 %v411
          %v444 = vunpack.c.l.b16 %v412
          %v445 = vunpack.c.l.b16 %v413
          %v446 = vunpack.c.l.b16 %v414
          %v447 = vunpack.c.l.b16 %v415
          %v448 = vunpack.c.l.b16 %v416
          %v449 = vunpack.c.l.b16 %v417
          %v450 = vunpack.c.l.b16 %v418
          %v451 = vunpack.c.l.b16 %v419
          %v452 = vunpack.c.l.b16 %v420
          %v453 = vunpack.c.l.b16 %v421
          %v454 = vunpack.c.l.b16 %v422
          %v455 = vunpack.c.l.b16 %v423
          %v456 = vunpack.c.l.b16 %v424
          %v457 = vpack.c.b16 %v442, %v441
          %v458 = vpack.c.b16 %v444, %v443
          %v459 = vpack.c.b16 %v446, %v445
          %v460 = vpack.c.b16 %v448, %v447
          %v461 = vpack.c.b16 %v450, %v449
          %v462 = vpack.c.b16 %v452, %v451
          %v463 = vpack.c.b16 %v454, %v453
          %v464 = vpack.c.b16 %v456, %v455
          %473 = vmatprep.subr.bf16.mxu0 0
          %474 = vmatpush1.bf16.msra.mxu0 %v457
          %475 = vmatprep.subr.bf16.mxu0 0
          %476 = vmatpush1.bf16.msra.mxu0 %v458
          %477 = vmatprep.subr.bf16.mxu0 0
          %478 = vmatpush1.bf16.msra.mxu0 %v459
          %479 = vmatprep.subr.bf16.mxu0 0
          %480 = vmatpush1.bf16.msra.mxu0 %v460
          %481 = vmatprep.subr.bf16.mxu0 0
          %482 = vmatpush1.bf16.msra.mxu0 %v461
          %483 = vmatprep.subr.bf16.mxu0 0
          %484 = vmatpush1.bf16.msra.mxu0 %v462
          %485 = vmatprep.subr.bf16.mxu0 0
          %486 = vmatpush1.bf16.msra.mxu0 %v463
          %487 = vmatprep.subr.bf16.mxu0 0
          %488 = vmatpush1.bf16.msra.mxu0 %v464
          %489 = vmatprep.subr.bf16.mxu0 0
          %490 = vmatpush1.bf16.msra.mxu0 0
          %491 = vmatprep.subr.bf16.mxu0 0
          %492 = vmatpush1.bf16.msra.mxu0 0
          %493 = vmatprep.subr.bf16.mxu0 0
          %494 = vmatpush1.bf16.msra.mxu0 0
          %495 = vmatprep.subr.bf16.mxu0 0
          %496 = vmatpush1.bf16.msra.mxu0 0
          %497 = vmatprep.subr.bf16.mxu0 0
          %498 = vmatpush1.bf16.msra.mxu0 0
          %499 = vmatprep.subr.bf16.mxu0 0
          %500 = vmatpush1.bf16.msra.mxu0 0
          %501 = vmatprep.subr.bf16.mxu0 0
          %502 = vmatpush1.bf16.msra.mxu0 0
          %503 = vmatprep.subr.bf16.mxu0 0
          %504 = vmatpush1.bf16.msra.mxu0 0
          %505 = vmatprep.mubr.bf16.mxu0 0
          %506 = vmatmul.mubr.bf16.gmra.mrb[0].mxu0 %v401
          %v507 = vpop.f32.mrb[0].mxu0
          %v508 = vadd.f32 0.0, %v507
          %v509 = vpop.f32.mrb[0].mxu0
          %v510 = vpop.f32.mrb[0].mxu0
          %v511 = vadd.f32 0.0, %v510
          %v512 = vpop.f32.mrb[0].mxu0
          %513 = vmatprep.mubr.bf16.mxu0 0
          %514 = vmatmul.mubr.bf16.gmra.mrb[0].mxu0 %v402
          %v515 = vpop.f32.mrb[0].mxu0
          %v516 = vadd.f32 0.0, %v515
          %v517 = vpop.f32.mrb[0].mxu0
          %v518 = vpop.f32.mrb[0].mxu0
          %v519 = vadd.f32 0.0, %v518
          %v520 = vpop.f32.mrb[0].mxu0
          %521 = vmatprep.mubr.bf16.mxu0 0
          %522 = vmatmul.mubr.bf16.gmra.mrb[0].mxu0 %v403
          %v523 = vpop.f32.mrb[0].mxu0
          %v524 = vadd.f32 0.0, %v523
          %v525 = vpop.f32.mrb[0].mxu0
          %v526 = vpop.f32.mrb[0].mxu0
          %v527 = vadd.f32 0.0, %v526
          %v528 = vpop.f32.mrb[0].mxu0
          %529 = vmatprep.mubr.bf16.mxu0 0
          %530 = vmatmul.mubr.bf16.gmra.mrb[0].mxu0 %v404
          %v531 = vpop.f32.mrb[0].mxu0
          %v532 = vadd.f32 0.0, %v531
          %v533 = vpop.f32.mrb[0].mxu0
          %v534 = vpop.f32.mrb[0].mxu0
          %v535 = vadd.f32 0.0, %v534
          %v536 = vpop.f32.mrb[0].mxu0
          %537 = vmatprep.mubr.bf16.mxu0 0
          %538 = vmatmul.mubr.bf16.gmra.mrb[0].mxu0 %v405
          %v539 = vpop.f32.mrb[0].mxu0
          %v540 = vadd.f32 0.0, %v539
          %v541 = vpop.f32.mrb[0].mxu0
          %v542 = vpop.f32.mrb[0].mxu0
          %v543 = vadd.f32 0.0, %v542
          %v544 = vpop.f32.mrb[0].mxu0
          %545 = vmatprep.mubr.bf16.mxu0 0
          %546 = vmatmul.mubr.bf16.gmra.mrb[0].mxu0 %v406
          %v547 = vpop.f32.mrb[0].mxu0
          %v548 = vadd.f32 0.0, %v547
          %v549 = vpop.f32.mrb[0].mxu0
          %v550 = vpop.f32.mrb[0].mxu0
          %v551 = vadd.f32 0.0, %v550
          %v552 = vpop.f32.mrb[0].mxu0
          %553 = vmatprep.mubr.bf16.mxu0 0
          %554 = vmatmul.mubr.bf16.gmra.mrb[0].mxu0 %v407
          %v555 = vpop.f32.mrb[0].mxu0
          %v556 = vadd.f32 0.0, %v555
          %v557 = vpop.f32.mrb[0].mxu0
          %v558 = vpop.f32.mrb[0].mxu0
          %v559 = vadd.f32 0.0, %v558
          %v560 = vpop.f32.mrb[0].mxu0
          %561 = vmatprep.mubr.bf16.mxu0 0
          %562 = vmatmul.mubr.bf16.gmra.mrb[0].mxu0 %v408
          %v563 = vpop.f32.mrb[0].mxu0
          %v564 = vadd.f32 0.0, %v563
          %v565 = vpop.f32.mrb[0].mxu0
          %v566 = vpop.f32.mrb[0].mxu0
          %v567 = vadd.f32 0.0, %v566
          %v568 = vpop.f32.mrb[0].mxu0
          %569 = vdwg.mxu0
          %v570 = vpack.c.bf16 %v511, %v508
          %v571 = vpack.c.bf16 %v519, %v516
          %v572 = vpack.c.bf16 %v527, %v524
          %v573 = vpack.c.bf16 %v535, %v532
          %v574 = vpack.c.bf16 %v543, %v540
          %v575 = vpack.c.bf16 %v551, %v548
          %v576 = vpack.c.bf16 %v559, %v556
          %v577 = vpack.c.bf16 %v567, %v564
          %578 = vst [vmem:[#allocation4] sm:$0xff] %v570
          %579 = vst [vmem:[#allocation4 + $0x8] sm:$0xff] %v571
          %580 = vst [vmem:[#allocation4 + $0x10] sm:$0xff] %v572
          %581 = vst [vmem:[#allocation4 + $0x18] sm:$0xff] %v573
          %582 = vst [vmem:[#allocation4 + $0x20] sm:$0xff] %v574
          %583 = vst [vmem:[#allocation4 + $0x28] sm:$0xff] %v575
          %584 = vst [vmem:[#allocation4 + $0x30] sm:$0xff] %v576
          %585 = vst [vmem:[#allocation4 + $0x38] sm:$0xff] %v577
        $region60: #{tpu_custom_call.1} parent=35 // pred_fallthru
          _
        %v586 = vld [vmem:[%s247] sm:$0xf]
        %v587 = vld [vmem:[%s247 + $0x4] sm:$0xf]
        %v588 = vld [vmem:[%s247 + $0x8] sm:$0xf]
        %v589 = vld [vmem:[%s247 + $0xc] sm:$0xf]
        %v590 = vld [vmem:[%s247 + $0x10] sm:$0xf]
        %v591 = vld [vmem:[%s247 + $0x14] sm:$0xf]
        %v592 = vld [vmem:[%s247 + $0x18] sm:$0xf]
        %v593 = vld [vmem:[%s247 + $0x1c] sm:$0xf]
        %v594 = vld [vmem:[#allocation4] sm:$0xff]
        %v595 = vld [vmem:[#allocation4 + $0x8] sm:$0xff]
        %v596 = vld [vmem:[#allocation4 + $0x10] sm:$0xff]
        %v597 = vld [vmem:[#allocation4 + $0x18] sm:$0xff]
        %v598 = vld [vmem:[#allocation4 + $0x20] sm:$0xff]
        %v599 = vld [vmem:[#allocation4 + $0x28] sm:$0xff]
        %v600 = vld [vmem:[#allocation4 + $0x30] sm:$0xff]
        %v601 = vld [vmem:[#allocation4 + $0x38] sm:$0xff]
        %v602 = vld [vmem:[%s296] sm:$0x1]
        %v604 = vlaneseq
        %v605 = vshrl.u32 %v604, 7
        %v606 = vsub.s32 0, %v605
        %v607 = vrot.slane %v602, %v606
        %v617 = vunpack.c.l.b16 %v586
        %v618 = vunpack.c.l.b16 %v587
        %v619 = vunpack.c.l.b16 %v588
        %v620 = vunpack.c.l.b16 %v589
        %v621 = vunpack.c.l.b16 %v590
        %v622 = vunpack.c.l.b16 %v591
        %v623 = vunpack.c.l.b16 %v592
        %v624 = vunpack.c.l.b16 %v593
        %v625 = vpack.c.b16 %v618, %v617
        %v626 = vpack.c.b16 %v620, %v619
        %v627 = vpack.c.b16 %v622, %v621
        %v628 = vpack.c.b16 %v624, %v623
        %633 = vmatprep.subr.bf16.mxu0 0
        %634 = vmatpush1.bf16.msra.mxu0 %v594
        %635 = vmatprep.subr.bf16.mxu0 0
        %636 = vmatpush1.bf16.msra.mxu0 %v595
        %637 = vmatprep.subr.bf16.mxu0 0
        %638 = vmatpush1.bf16.msra.mxu0 %v596
        %639 = vmatprep.subr.bf16.mxu0 0
        %640 = vmatpush1.bf16.msra.mxu0 %v597
        %641 = vmatprep.subr.bf16.mxu0 0
        %642 = vmatpush1.bf16.msra.mxu0 %v598
        %643 = vmatprep.subr.bf16.mxu0 0
        %644 = vmatpush1.bf16.msra.mxu0 %v599
        %645 = vmatprep.subr.bf16.mxu0 0
        %646 = vmatpush1.bf16.msra.mxu0 %v600
        %647 = vmatprep.subr.bf16.mxu0 0
        %648 = vmatpush1.bf16.msra.mxu0 %v601
        %649 = vmatprep.subr.bf16.mxu0 0
        %650 = vmatpush1.bf16.msra.mxu0 0
        %651 = vmatprep.subr.bf16.mxu0 0
        %652 = vmatpush1.bf16.msra.mxu0 0
        %653 = vmatprep.subr.bf16.mxu0 0
        %654 = vmatpush1.bf16.msra.mxu0 0
        %655 = vmatprep.subr.bf16.mxu0 0
        %656 = vmatpush1.bf16.msra.mxu0 0
        %657 = vmatprep.subr.bf16.mxu0 0
        %658 = vmatpush1.bf16.msra.mxu0 0
        %659 = vmatprep.subr.bf16.mxu0 0
        %660 = vmatpush1.bf16.msra.mxu0 0
        %661 = vmatprep.subr.bf16.mxu0 0
        %662 = vmatpush1.bf16.msra.mxu0 0
        %663 = vmatprep.subr.bf16.mxu0 0
        %664 = vmatpush1.bf16.msra.mxu0 0
        %665 = vmatprep.mubr.bf16.mxu0 0
        %666 = vmatmul.mubr.bf16.gmra.mrb[0].mxu0 %v625
        %v667 = vpop.f32.mrb[0].mxu0
        %v668 = vadd.f32 %v607, %v667
        %v669 = vpop.f32.mrb[0].mxu0
        %v670 = vpop.f32.mrb[0].mxu0
        %v671 = vadd.f32 %v607, %v670
        %v672 = vpop.f32.mrb[0].mxu0
        %673 = vmatprep.mubr.bf16.mxu0 0
        %674 = vmatmul.mubr.bf16.gmra.mrb[0].mxu0 %v626
        %v675 = vpop.f32.mrb[0].mxu0
        %v676 = vadd.f32 %v607, %v675
        %v677 = vpop.f32.mrb[0].mxu0
        %v678 = vpop.f32.mrb[0].mxu0
        %v679 = vadd.f32 %v607, %v678
        %v680 = vpop.f32.mrb[0].mxu0
        %681 = vmatprep.mubr.bf16.mxu0 0
        %682 = vmatmul.mubr.bf16.gmra.mrb[0].mxu0 %v627
        %v683 = vpop.f32.mrb[0].mxu0
        %v684 = vadd.f32 %v607, %v683
        %v685 = vpop.f32.mrb[0].mxu0
        %v686 = vpop.f32.mrb[0].mxu0
        %v687 = vadd.f32 %v607, %v686
        %v688 = vpop.f32.mrb[0].mxu0
        %689 = vmatprep.mubr.bf16.mxu0 0
        %690 = vmatmul.mubr.bf16.gmra.mrb[0].mxu0 %v628
        %v691 = vpop.f32.mrb[0].mxu0
        %v692 = vadd.f32 %v607, %v691
        %v693 = vpop.f32.mrb[0].mxu0
        %v694 = vpop.f32.mrb[0].mxu0
        %v695 = vadd.f32 %v607, %v694
        %v696 = vpop.f32.mrb[0].mxu0
        %697 = vdwg.mxu0
        %s698 = smul.u32 %s27, 64
        %p699 = scmp.lt.s32.totalorder %s26, 2
        // Predicated region
        $region61: #{tpu_custom_call.1} parent=35 // pred_check
          %p700 = pneg %p699
        $region62: #{tpu_custom_call.1} parent=35 // pred_check_branch
          %702 = sbr.rel (%p700) target = $region64
        $region63: #{tpu_custom_call.1} parent=35 // pred_region
          %v703 = vmax.f32 %v668, 0.0
          %v704 = vmax.f32 %v671, 0.0
          %v705 = vmax.f32 %v676, 0.0
          %v706 = vmax.f32 %v679, 0.0
          %v707 = vmax.f32 %v684, 0.0
          %v708 = vmax.f32 %v687, 0.0
          %v709 = vmax.f32 %v692, 0.0
          %v710 = vmax.f32 %v695, 0.0
          %v711 = vpack.c.bf16 %v704, %v703
          %v712 = vpack.c.bf16 %v706, %v705
          %v713 = vpack.c.bf16 %v708, %v707
          %v714 = vpack.c.bf16 %v710, %v709
          %s715 = sshra.s32 %s698, 4
          %s716 = sand.u32 %s698, 15
          %s717 = smul.addr %s715, 8
          %s718 = scalar_lea.vmem [#allocation3], %s717
          %719 = vst [vmem:[%s718] sm:$0xff] %v711
          %720 = vst [vmem:[%s718 + $0x8] sm:$0xff] %v712
          %721 = vst [vmem:[%s718 + $0x10] sm:$0xff] %v713
          %722 = vst [vmem:[%s718 + $0x18] sm:$0xff] %v714
          %723 = vst [vmem:[%s292] sm:$0xff] %v703
          %724 = vst [vmem:[%s292 + $0x8] sm:$0xff] %v704
          %725 = vst [vmem:[%s292 + $0x10] sm:$0xff] %v705
          %726 = vst [vmem:[%s292 + $0x18] sm:$0xff] %v706
          %727 = vst [vmem:[%s292 + $0x20] sm:$0xff] %v707
          %728 = vst [vmem:[%s292 + $0x28] sm:$0xff] %v708
          %729 = vst [vmem:[%s292 + $0x30] sm:$0xff] %v709
          %730 = vst [vmem:[%s292 + $0x38] sm:$0xff] %v710
        $region64: #{tpu_custom_call.1} parent=35 // pred_fallthru
          _
        %p731 = scmp.ge.s32.totalorder %s26, 2
        // Predicated region
        $region65: #{tpu_custom_call.1} parent=35 // pred_check
          %p732 = pneg %p731
        $region66: #{tpu_custom_call.1} parent=35 // pred_check_branch
          %734 = sbr.rel (%p732) target = $region68
        $region67: #{tpu_custom_call.1} parent=35 // pred_region
          %735 = vst [vmem:[%s292] sm:$0xff] %v668
          %736 = vst [vmem:[%s292 + $0x8] sm:$0xff] %v671
          %737 = vst [vmem:[%s292 + $0x10] sm:$0xff] %v676
          %738 = vst [vmem:[%s292 + $0x18] sm:$0xff] %v679
          %739 = vst [vmem:[%s292 + $0x20] sm:$0xff] %v684
          %740 = vst [vmem:[%s292 + $0x28] sm:$0xff] %v687
          %741 = vst [vmem:[%s292 + $0x30] sm:$0xff] %v692
          %742 = vst [vmem:[%s292 + $0x38] sm:$0xff] %v695
        $region68: #{tpu_custom_call.1} parent=35 // pred_fallthru
          _
        %s743 = sand.u32 %s143, 1
        %s744 = scalar_lea.sflag [#allocation7], %s743
        %s745 = sand.u32 %s143, 1
        %s746 = smul.addr %s745, 64
        %s747 = scalar_lea.vmem [#allocation11], %s746
        // Predicated region
        $region69: #{tpu_custom_call.1} parent=35 // pred_check
          %p748 = pneg %p153
        $region70: #{tpu_custom_call.1} parent=35 // pred_check_branch
          %750 = sbr.rel (%p748) target = $region72
        $region71: #{tpu_custom_call.1} parent=35 // pred_region
          %s751 = smul.u32 8, %s27
          %s753 = ssub.s32 1024, 1024
          %754 = vsyncadd %s744, %s753
          %s755 = smul.addr %s26, 16
          %s756 = sadd.s32 %s751, %s755
          %s757 = smul.addr %s756, 128
          %s758 = scalar_lea.hbm %s4, %s757
          %s759 = sshll.u32 %s747, 4
          %s760 = int_to_ptr.vmem [resolvable:$true] %s759
          %765 = dma.vmem_to_hbm [thread:$0]  %s760, 1024, %s758, %s744, 128, 128, 8
        $region72: #{tpu_custom_call.1} parent=35 // pred_fallthru
          _
      $region36: #{tpu_custom_call.1} parent=5 // pred_fallthru
        _
      %p766 = scmp.le.s32.totalorder 2, %s17
      // Predicated region
      $region73: #{tpu_custom_call.1} parent=5 // pred_check
        %p767 = pneg %p766
      $region74: #{tpu_custom_call.1} parent=5 // pred_check_branch
        %769 = sbr.rel (%p767) target = $region76
      $region75: #{tpu_custom_call.1} parent=5 // pred_region
        %s770 = ssub.s32 %s17, 2
        // Predicated region
        $region77: #{tpu_custom_call.1} parent=75 // pred_check
          %p771 = pneg %p159
        $region78: #{tpu_custom_call.1} parent=75 // pred_check_branch
          %773 = sbr.rel (%p771) target = $region80
        $region79: #{tpu_custom_call.1} parent=75 // pred_region
          %s774 = sand.u32 %s144, 1
          %s775 = scalar_lea.sflag [#allocation7], %s774
          %s776 = sand.u32 %s144, 1
          %s777 = smul.addr %s776, 64
          %s778 = scalar_lea.vmem [#allocation11], %s777
          %779 = dma.done %s775, 1024
        $region80: #{tpu_custom_call.1} parent=75 // pred_fallthru
          _
      $region76: #{tpu_custom_call.1} parent=5 // pred_fallthru
        _
    $region6: #{tpu_custom_call.1} parent=1 // loop_footer
      %s21 = sadd.s32 1, %s17
    $region7: #{tpu_custom_call.1} parent=1 // loop_footer_branch
      %16 = sbr.rel target = $region3
    $region8: #{tpu_custom_call.1} parent=1 // loop_exit
      _
    %780 = vsyncpa [#allocation6], 1
    %s781 = scalar_lea.sflag [#allocation6], 1
    %782 = vsyncpa %s781, 1
    %783 = vsyncpa [#allocation9], 1
    %784 = vsyncpa [#allocation7], 1
    %s785 = scalar_lea.sflag [#allocation7], 1
    %786 = vsyncpa %s785, 1

</llo_original>
